<compile_context>
chip_gen: v5e
topology: v5e:2x2
jax: 0.10.0
libtpu: 0.0.40
codegen_flags: <defaults>
</compile_context>

<pallas_src>
import functools
import math

import jax
import jax.numpy as jnp
from jax.experimental import pallas as pl
from jax.experimental.pallas import tpu as pltpu

_LANE_TILE = 512  # output lane tile when l_out is large (multiple of 128)


def kronecker_weight(A, Fp):
    """sum_i kron(A[i], F[i]) -> (out_features, in_features, kernel_size)."""
    n = A.shape[0]
    out_f = n * Fp.shape[1]
    in_f = n * Fp.shape[2]
    # res[i, a, o', b, i', k] = A[i, a, b] * F[i, o', i', k]
    res = A[:, :, None, :, None, None] * Fp[:, None, :, None, :, :]
    return res.reshape(n, out_f, in_f, Fp.shape[3]).sum(axis=0)


def _make_phm_conv1d_kernel(K, dilation, stride, tl, ti, pad_l, pad_r, length,
                            need_mask, has_halo):
    """One (Cin, ti) input block (+ optional tiny halo) -> one (Cout, tl) output block."""

    def body(x_ref, h_ref, w_ref, b_ref, o_ref):
        main = x_ref[...]                                     # (Cin, ti)
        if need_mask:
            # Boundary input block may extend past L: zero the garbage tail (it maps to
            # the conv's right zero-padding region, so zero is also the correct value).
            j = pl.program_id(1)
            lane = jax.lax.broadcasted_iota(jnp.int32, main.shape, 1)
            main = jnp.where(lane < (length - j * ti), main, jnp.zeros_like(main))

        # Assemble the input window for this tile: [left halo | main block | right halo].
        if has_halo:
            halo = h_ref[...]                                 # (Cin, pad_l + pad_r)
            pieces = []
            if pad_l > 0:
                pieces.append(halo[:, :pad_l])
            pieces.append(main)
            if pad_r > 0:
                pieces.append(halo[:, pad_l:pad_l + pad_r])
            win = jnp.concatenate(pieces, axis=1)
        else:
            win = main

        # im2col over the K taps: stack shifted slices along sublanes -> (K*Cin, tl),
        # then a single MXU matmul with the (Cout, K*Cin) folded PHM weight.
        cols = []
        for kk in range(K):
            off = kk * dilation
            if stride == 1:
                cols.append(win[:, off:off + tl])
            else:
                # TODO(synk): strided taps use a lane-strided value slice (non-default path).
                cols.append(jax.lax.slice_in_dim(
                    win, off, off + (tl - 1) * stride + 1, stride=stride, axis=1))
        xcol = jnp.concatenate(cols, axis=0) if K > 1 else cols[0]

        acc = jnp.dot(w_ref[...], xcol, preferred_element_type=jnp.float32)
        o_ref[...] = (acc + b_ref[...]).astype(o_ref.dtype)

    if has_halo:
        def kernel(x_ref, h_ref, w_ref, b_ref, o_ref):
            body(x_ref, h_ref, w_ref, b_ref, o_ref)
    else:
        def kernel(x_ref, w_ref, b_ref, o_ref):
            body(x_ref, None, w_ref, b_ref, o_ref)
    return kernel


@functools.partial(jax.jit, static_argnames=("stride", "padding", "dilation"))
def phm_conv1d(x, A, Fp, bias, *, stride=1, padding=0, dilation=1):
    n = A.shape[0]
    out_f = n * Fp.shape[1]
    K = Fp.shape[3]

    # Parameter glue: build the PHM weight (tiny) and fold taps into the contraction dim:
    # w2d[o, k*Cin + i] = W[o, i, k].
    W = kronecker_weight(A, Fp)                               # (Cout, Cin, K)
    x = x.astype(W.dtype)                                     # matches input.type(weight.type())
    B, c_in, L = x.shape
    w2d = jnp.transpose(W, (0, 2, 1)).reshape(out_f, K * c_in)

    l_out = (L + 2 * padding - dilation * (K - 1) - 1) // stride + 1
    if l_out <= 0:
        raise ValueError(f"non-positive output length: {l_out}")
    if bias is None:
        bias = jnp.zeros((out_f,), W.dtype)
    b2 = bias.reshape(out_f, 1).astype(W.dtype)

    # Length tiling: lane-dense tiles (multiple of 128) when l_out is large; otherwise a
    # single full-extent block (block == full dim is always legal).
    if l_out <= _LANE_TILE:
        tl, n_tiles, ti = l_out, 1, L
    else:
        tl = _LANE_TILE
        n_tiles = -(-l_out // tl)
        ti = tl * stride

    pad_l = padding
    pad_r = max(0, (tl - 1) * stride + dilation * (K - 1) + 1 - pad_l - ti)
    hw = pad_l + pad_r
    need_mask = n_tiles * ti > L

    # Tiny halo sidecar: per tile, the `pad_l` columns left of its main block and `pad_r`
    # columns right of it (conv zero-padding / neighbour-tile columns).  This replaces a
    # full jnp.pad(x) copy with a gather of only n_tiles*hw columns.
    operands = [x]
    in_specs = [pl.BlockSpec((None, c_in, ti), lambda b, j: (b, 0, j))]       # x main blocks
    if hw > 0:
        starts = (jnp.arange(n_tiles) * ti)[:, None]
        idx = jnp.concatenate(
            [starts - padding + jnp.arange(pad_l)[None, :],
             starts + ti + jnp.arange(pad_r)[None, :]], axis=1)               # (n_tiles, hw)
        valid = (idx >= 0) & (idx < L)
        halo = jnp.take(x, jnp.clip(idx, 0, L - 1).reshape(-1), axis=2)
        halo = halo.reshape(B, c_in, n_tiles, hw)
        halo = jnp.where(valid[None, None], halo, jnp.zeros_like(halo))
        halo = jnp.transpose(halo, (0, 2, 1, 3))                              # (B, nt, Cin, hw)
        operands.append(halo)
        in_specs.append(pl.BlockSpec((None, None, c_in, hw), lambda b, j: (b, j, 0, 0)))

    operands += [w2d, b2]
    in_specs += [
        pl.BlockSpec((out_f, K * c_in), lambda b, j: (0, 0)),                 # folded weight
        pl.BlockSpec((out_f, 1), lambda b, j: (0, 0)),                        # bias
    ]

    kernel = _make_phm_conv1d_kernel(
        K, dilation, stride, tl, ti, pad_l, pad_r, L, need_mask, hw > 0)

    itemsize = W.dtype.itemsize
    halo_bytes = B * n_tiles * c_in * hw * itemsize
    cost = pl.CostEstimate(
        flops=2 * B * out_f * l_out * c_in * K,
        transcendentals=0,
        bytes_accessed=(x.size + B * out_f * l_out + w2d.size + out_f) * itemsize + halo_bytes,
    )

    return pl.pallas_call(
        kernel,
        out_shape=jax.ShapeDtypeStruct((B, out_f, l_out), W.dtype),
        grid_spec=pltpu.PrefetchScalarGridSpec(
            num_scalar_prefetch=0,
            grid=(B, n_tiles),
            in_specs=in_specs,
            out_specs=pl.BlockSpec((None, out_f, tl), lambda b, j: (b, 0, j)),
        ),
        compiler_params=pltpu.CompilerParams(
            dimension_semantics=("parallel", "parallel")),
        cost_estimate=cost,
    )(*operands)


def _reference(x, A, Fp, bias, *, stride, padding, dilation):
    W = kronecker_weight(A, Fp)
    y = jax.lax.conv_general_dilated(
        x.astype(W.dtype), W,
        window_strides=(stride,),
        padding=[(padding, padding)],
        rhs_dilation=(dilation,),
        dimension_numbers=("NCH", "OIH", "NCH"),
    )
    return y + bias[None, :, None]


if __name__ == "__main__":
    # Module hyperparameters (small, consistent with PHMConv1d.__init__).
    n = 4
    in_features = 8
    out_features = 8
    kernel_size = 3

    key = jax.random.PRNGKey(0)
    k_a, k_f, k_b, k_x1, k_x2 = jax.random.split(key, 5)

    # Deterministic "xavier-like" uniform init for A and F (shapes from __init__).
    def xavier_uniform(k, shape):
        fan_in = shape[-2] * math.prod(shape[-1:]) if len(shape) > 1 else shape[0]
        fan_out = shape[-3] if len(shape) > 2 else shape[0]
        bound = math.sqrt(6.0 / (fan_in + fan_out))
        return jax.random.uniform(k, shape, jnp.float32, -bound, bound)

    A = xavier_uniform(k_a, (n, n, n))
    Fp = xavier_uniform(k_f, (n, out_features // n, in_features // n, kernel_size))
    b_bound = 1.0 / math.sqrt(in_features)
    bias = jax.random.uniform(k_b, (out_features,), jnp.float32, -b_bound, b_bound)

    def check(x, *, stride=1, padding=0, dilation=1):
        y = phm_conv1d(x, A, Fp, bias, stride=stride, padding=padding, dilation=dilation)
        y = jax.block_until_ready(y)
        y_ref = _reference(x, A, Fp, bias, stride=stride, padding=padding, dilation=dilation)
        assert y.shape == y_ref.shape, (y.shape, y_ref.shape)
        err = float(jnp.max(jnp.abs(y - y_ref)))
        assert jnp.allclose(y, y_ref, atol=1e-5, rtol=1e-5), err

    # layout: x is NCL (batch, in_features, length)
    x_small = jax.random.normal(k_x1, (2, in_features, 16), jnp.float32)
    x_long = jax.random.normal(k_x2, (2, in_features, 1300), jnp.float32)

    # Small shape, "same" padding: single full-extent tile with halo sidecar.
    check(x_small, stride=1, padding=1, dilation=1)
    # Small shape, no padding, no halo: exercises the halo-free (fewest-DMA) path.
    check(x_small, stride=1, padding=0, dilation=1)
    # Long sequence: lane-dense 512-wide multi-tile path (partial last tile, in-kernel
    # boundary masking, halo sidecar across tiles).
    check(x_long, stride=1, padding=1, dilation=1)
    # Long sequence, dilated taps, zero conv-padding (halo carries only inter-tile columns).
    check(x_long, stride=1, padding=0, dilation=2)

    print("KERNEL_OK")
</pallas_src>

<mosaic_0001>
module attributes {stable_mosaic.version = 11 : i64} {
  func.func @kernel(%arg0: i32, %arg1: i32, %arg2: memref<1x8x16xf32, #tpu.memory_space<vmem>>, %arg3: memref<1x1x8x2xf32, #tpu.memory_space<vmem>>, %arg4: memref<8x24xf32, #tpu.memory_space<vmem>>, %arg5: memref<8x1xf32, #tpu.memory_space<vmem>>, %arg6: memref<1x8x16xf32, #tpu.memory_space<vmem>>) attributes {dimension_semantics = [#tpu.dimension_semantics<parallel>, #tpu.dimension_semantics<parallel>], iteration_bounds = array<i64: 2, 1>, scalar_prefetch = 0 : i64, scratch_operands = 0 : i64, tpu.core_type = #tpu.core_type<tc>, window_params = [{transform_indices = @transform_0, window_bounds = array<i64: 1, 8, 16>}, {transform_indices = @transform_1, window_bounds = array<i64: 1, 1, 8, 2>}, {pipeline_mode = #tpu.pipeline_mode<synchronous>, transform_indices = @transform_2, window_bounds = array<i64: 8, 24>}, {pipeline_mode = #tpu.pipeline_mode<synchronous>, transform_indices = @transform_3, window_bounds = array<i64: 8, 1>}, {transform_indices = @transform_4, window_bounds = array<i64: 1, 8, 16>}]} {
    %c0 = arith.constant 0 : index
    %c0_0 = arith.constant 0 : index
    %c0_1 = arith.constant 0 : index
    %0 = vector.load %arg2[%c0, %c0_0, %c0_1] : memref<1x8x16xf32, #tpu.memory_space<vmem>>, vector<1x8x16xf32>
    %1 = vector.shape_cast %0 : vector<1x8x16xf32> to vector<8x16xf32>
    %c0_2 = arith.constant 0 : index
    %c0_3 = arith.constant 0 : index
    %c0_4 = arith.constant 0 : index
    %c0_5 = arith.constant 0 : index
    %2 = vector.load %arg3[%c0_2, %c0_3, %c0_4, %c0_5] : memref<1x1x8x2xf32, #tpu.memory_space<vmem>>, vector<1x1x8x2xf32>
    %3 = vector.shape_cast %2 : vector<1x1x8x2xf32> to vector<8x2xf32>
    %4 = vector.extract_strided_slice %3 {offsets = [0, 0], sizes = [8, 1], strides = [1, 1]} : vector<8x2xf32> to vector<8x1xf32>
    %5 = vector.extract_strided_slice %3 {offsets = [0, 1], sizes = [8, 1], strides = [1, 1]} : vector<8x2xf32> to vector<8x1xf32>
    %6 = tpu.concatenate %4, %1, %5 in 1 : vector<8x1xf32>, vector<8x16xf32>, vector<8x1xf32> -> vector<8x18xf32>
    %7 = vector.extract_strided_slice %6 {offsets = [0, 0], sizes = [8, 16], strides = [1, 1]} : vector<8x18xf32> to vector<8x16xf32>
    %8 = vector.extract_strided_slice %6 {offsets = [0, 1], sizes = [8, 16], strides = [1, 1]} : vector<8x18xf32> to vector<8x16xf32>
    %9 = vector.extract_strided_slice %6 {offsets = [0, 2], sizes = [8, 16], strides = [1, 1]} : vector<8x18xf32> to vector<8x16xf32>
    %10 = tpu.concatenate %7, %8, %9 in 0 : vector<8x16xf32>, vector<8x16xf32>, vector<8x16xf32> -> vector<24x16xf32>
    %c0_6 = arith.constant 0 : index
    %c0_7 = arith.constant 0 : index
    %11 = vector.load %arg4[%c0_6, %c0_7] : memref<8x24xf32, #tpu.memory_space<vmem>>, vector<8x24xf32>
    %cst = arith.constant dense<0.000000e+00> : vector<8x16xf32>
    %12 = tpu.matmul %11, %10, %cst {dimension_numbers = #tpu.dot_dimension_numbers<[1], [0], [0], [1], [0, 0, 1, 1], [], []>} : vector<8x24xf32>, vector<24x16xf32>, vector<8x16xf32> -> vector<8x16xf32>
    %c0_8 = arith.constant 0 : index
    %c0_9 = arith.constant 0 : index
    %13 = vector.load %arg5[%c0_8, %c0_9] : memref<8x1xf32, #tpu.memory_space<vmem>>, vector<8x1xf32>
    %14 = vector.broadcast %13 : vector<8x1xf32> to vector<8x16xf32>
    %15 = arith.addf %12, %14 : vector<8x16xf32>
    %c0_10 = arith.constant 0 : index
    %c0_11 = arith.constant 0 : index
    %c0_12 = arith.constant 0 : index
    %16 = vector.load %arg6[%c0_10, %c0_11, %c0_12] : memref<1x8x16xf32, #tpu.memory_space<vmem>>, vector<1x8x16xf32>
    %17 = vector.shape_cast %16 : vector<1x8x16xf32> to vector<8x16xf32>
    %18 = vector.shape_cast %15 : vector<8x16xf32> to vector<1x8x16xf32>
    tpu.vector_store %arg6[%c0_10, %c0_11, %c0_12], %18 {strides = array<i32>} : memref<1x8x16xf32, #tpu.memory_space<vmem>>, vector<1x8x16xf32>,
    return
  }
  func.func @transform_0(%arg0: i32, %arg1: i32) -> (i32, i32, i32) {
    %c0_i32 = arith.constant 0 : i32
    %c0_i32_0 = arith.constant 0 : i32
    return %arg0, %c0_i32, %arg1 : i32, i32, i32
  }
  func.func @transform_1(%arg0: i32, %arg1: i32) -> (i32, i32, i32, i32) {
    %c0_i32 = arith.constant 0 : i32
    %c0_i32_0 = arith.constant 0 : i32
    %c0_i32_1 = arith.constant 0 : i32
    return %arg0, %arg1, %c0_i32, %c0_i32_0 : i32, i32, i32, i32
  }
  func.func @transform_2(%arg0: i32, %arg1: i32) -> (i32, i32) {
    %c0_i32 = arith.constant 0 : i32
    %c0_i32_0 = arith.constant 0 : i32
    %c0_i32_1 = arith.constant 0 : i32
    return %c0_i32, %c0_i32_0 : i32, i32
  }
  func.func @transform_3(%arg0: i32, %arg1: i32) -> (i32, i32) {
    %c0_i32 = arith.constant 0 : i32
    %c0_i32_0 = arith.constant 0 : i32
    %c0_i32_1 = arith.constant 0 : i32
    return %c0_i32, %c0_i32_0 : i32, i32
  }
  func.func @transform_4(%arg0: i32, %arg1: i32) -> (i32, i32, i32) {
    %c0_i32 = arith.constant 0 : i32
    %c0_i32_0 = arith.constant 0 : i32
    return %arg0, %c0_i32, %arg1 : i32, i32, i32
  }
}

</mosaic_0001>

<llo_original>
// kernel: phm_conv1d.1
$region0: #{phm_conv1d.1}
  #allocation0 [shape = 'u32[]', space=smem, size = 0x4, offset = 0x4, fixed_abs, tag = 'smem constant byte address 0x4 - core index']
  #allocation1 [shape = 'u32[72,128]{1,0:T(1,128)}', space=vmem, size = 0x9000, scoped, tag = 'internal scratch']
  %s0 = inlined_call_operand.vmem [shape: f32[2,8,16], index: 0, kind: input, shape index: {}]
  %s1 = inlined_call_operand.vmem [shape: f32[2,1,8,2], index: 1, kind: input, shape index: {}]
  %s2 = inlined_call_operand.vmem [shape: f32[8,24], index: 2, kind: input, shape index: {}]
  %s3 = inlined_call_operand.vmem [shape: f32[8,1], index: 3, kind: input, shape index: {}]
  %s4 = inlined_call_operand.hbm [shape: f32[2,8,16], index: 4, kind: output, shape index: {}]
  %s5 = sld [smem:[#allocation0]]
  $region49: #{phm_conv1d.1} parent=0
    _
  %s7 = ssub.s32 1, %s5
  %s8 = scalar_select 0, %s7, %s5
  $region1: #{phm_conv1d.1} parent=0
    #allocation2 [shape = 'u8[8192]{0}', space=vmem, size = 0x2000, scoped, tag = 'output window, operand 0']
    #allocation3 [shape = 's32[2]{0}', space=sflag, size = 0x8, scoped, tag = 'scoped memory for phm_conv1d.1']
    %9 = vsyncpa [#allocation3], 0
    %s10 = scalar_lea.sflag [#allocation3], 1
    %11 = vsyncpa %s10, 0
    loop: start=0, step=1, limit=4
    $region2: #{phm_conv1d.1} parent=1 // loop_pre_header
      _
    $region3: #{phm_conv1d.1} parent=1 // loop_header
      %s13 = sphi 0, %s17
      %p14 = scmp.ge.s32.totalorder %s13, 4
      %s20 = sphi 0, %s32
      %s21 = sphi 0, %s28
      %s22 = sphi 0, %s20
      %s23 = sphi 0, %s21
      %s24 = sphi 0, %s22
      %s25 = sphi 0, %s23
      %s37 = sphi 0, %s39
      %s40 = sphi 0, %s37
      %s41 = sphi 0, %s40
      %s57 = sphi 0, %s41
      %s65 = sphi 0, %s67
      %s68 = sphi 0, %s65
      %s69 = sphi 0, %s68
      %s85 = sphi 0, %s69
      %s89 = sphi 0, %s89
      %s91 = sphi 0, %s89
      %s92 = sphi 0, %s91
      %s106 = sphi 0, %s92
      %s110 = sphi 0, %s110
      %s112 = sphi 0, %s110
      %s113 = sphi 0, %s112
      %s127 = sphi 0, %s113
      %s135 = sphi 0, %s137
      %s138 = sphi 0, %s135
      %s139 = sphi 0, %s138
      %s155 = sphi 0, %s139
    $region4: #{phm_conv1d.1} parent=1 // loop_header_branch
      %16 = sbr.rel (%p14) target = $region8
    $region5: #{phm_conv1d.1} parent=1 // loop_body
      %s18 = ssub.s32 %s13, 1
      %s19 = ssub.s32 %s13, 2
      %s26 = sadd.s32 1, %s21
      %p27 = scmp.ge.s32.totalorder %s26, 1
      %s28 = scalar_select %p27, 0, %s26
      %s29 = sadd.s32 1, %s20
      %s30 = scalar_select %p27, %s29, %s20
      %p31 = scmp.ge.s32.totalorder %s30, 2
      %s32 = scalar_select %p31, 0, %s30
      %s33 = ssub.s32 %s20, %s32
      %s34 = ssub.s32 %s21, %s28
      %s35 = sor.u32 %s33, %s34
      %p36 = scmp.eq.s32.totalorder %s35, 0
      %s38 = sadd.s32 %s37, 1
      %s39 = scalar_select %p36, %s37, %s38
      %p42 = pneg %p36
      %p43 = scmp.eq.s32.totalorder %s13, 1
      %p44 = por %p42, %p43
      %p45 = scmp.ne.s32.totalorder %s37, %s40
      %p46 = scmp.eq.s32.totalorder %s13, 0
      %p47 = por %p45, %p46
      %p48 = scmp.ne.s32.totalorder %s37, %s40
      %p49 = scmp.eq.s32.totalorder %s18, 1
      %p50 = por %p48, %p49
      %p51 = scmp.ne.s32.totalorder %s40, %s41
      %p52 = scmp.eq.s32.totalorder %s18, 0
      %p53 = por %p51, %p52
      %p54 = scmp.ne.s32.totalorder %s40, %s41
      %p55 = scmp.eq.s32.totalorder %s19, 1
      %p56 = por %p54, %p55
      %p58 = scmp.ne.s32.totalorder %s41, %s57
      %p59 = scmp.eq.s32.totalorder %s19, 0
      %p60 = por %p58, %p59
      %s61 = ssub.s32 %s20, %s32
      %s62 = ssub.s32 %s21, %s28
      %s63 = sor.u32 %s61, %s62
      %p64 = scmp.eq.s32.totalorder %s63, 0
      %s66 = sadd.s32 %s65, 1
      %s67 = scalar_select %p64, %s65, %s66
      %p70 = pneg %p64
      %p71 = scmp.eq.s32.totalorder %s13, 1
      %p72 = por %p70, %p71
      %p73 = scmp.ne.s32.totalorder %s65, %s68
      %p74 = scmp.eq.s32.totalorder %s13, 0
      %p75 = por %p73, %p74
      %p76 = scmp.ne.s32.totalorder %s65, %s68
      %p77 = scmp.eq.s32.totalorder %s18, 1
      %p78 = por %p76, %p77
      %p79 = scmp.ne.s32.totalorder %s68, %s69
      %p80 = scmp.eq.s32.totalorder %s18, 0
      %p81 = por %p79, %p80
      %p82 = scmp.ne.s32.totalorder %s68, %s69
      %p83 = scmp.eq.s32.totalorder %s19, 1
      %p84 = por %p82, %p83
      %p86 = scmp.ne.s32.totalorder %s69, %s85
      %p87 = scmp.eq.s32.totalorder %s19, 0
      %p88 = por %p86, %p87
      %s90 = sadd.s32 %s89, 1
      %p93 = scmp.eq.s32.totalorder %s13, 1
      %p94 = scmp.ne.s32.totalorder %s89, %s91
      %p95 = scmp.eq.s32.totalorder %s13, 0
      %p96 = por %p94, %p95
      %p97 = scmp.ne.s32.totalorder %s89, %s91
      %p98 = scmp.eq.s32.totalorder %s18, 1
      %p99 = por %p97, %p98
      %p100 = scmp.ne.s32.totalorder %s91, %s92
      %p101 = scmp.eq.s32.totalorder %s18, 0
      %p102 = por %p100, %p101
      %p103 = scmp.ne.s32.totalorder %s91, %s92
      %p104 = scmp.eq.s32.totalorder %s19, 1
      %p105 = por %p103, %p104
      %p107 = scmp.ne.s32.totalorder %s92, %s106
      %p108 = scmp.eq.s32.totalorder %s19, 0
      %p109 = por %p107, %p108
      %s111 = sadd.s32 %s110, 1
      %p114 = scmp.eq.s32.totalorder %s13, 1
      %p115 = scmp.ne.s32.totalorder %s110, %s112
      %p116 = scmp.eq.s32.totalorder %s13, 0
      %p117 = por %p115, %p116
      %p118 = scmp.ne.s32.totalorder %s110, %s112
      %p119 = scmp.eq.s32.totalorder %s18, 1
      %p120 = por %p118, %p119
      %p121 = scmp.ne.s32.totalorder %s112, %s113
      %p122 = scmp.eq.s32.totalorder %s18, 0
      %p123 = por %p121, %p122
      %p124 = scmp.ne.s32.totalorder %s112, %s113
      %p125 = scmp.eq.s32.totalorder %s19, 1
      %p126 = por %p124, %p125
      %p128 = scmp.ne.s32.totalorder %s113, %s127
      %p129 = scmp.eq.s32.totalorder %s19, 0
      %p130 = por %p128, %p129
      %s131 = ssub.s32 %s20, %s32
      %s132 = ssub.s32 %s21, %s28
      %s133 = sor.u32 %s131, %s132
      %p134 = scmp.eq.s32.totalorder %s133, 0
      %s136 = sadd.s32 %s135, 1
      %s137 = scalar_select %p134, %s135, %s136
      %p140 = pneg %p134
      %p141 = scmp.eq.s32.totalorder %s13, 1
      %p142 = por %p140, %p141
      %p143 = scmp.ne.s32.totalorder %s135, %s138
      %p144 = scmp.eq.s32.totalorder %s13, 0
      %p145 = por %p143, %p144
      %p146 = scmp.ne.s32.totalorder %s135, %s138
      %p147 = scmp.eq.s32.totalorder %s18, 1
      %p148 = por %p146, %p147
      %p149 = scmp.ne.s32.totalorder %s138, %s139
      %p150 = scmp.eq.s32.totalorder %s18, 0
      %p151 = por %p149, %p150
      %p152 = scmp.ne.s32.totalorder %s138, %s139
      %p153 = scmp.eq.s32.totalorder %s19, 1
      %p154 = por %p152, %p153
      %p156 = scmp.ne.s32.totalorder %s139, %s155
      %p157 = scmp.eq.s32.totalorder %s19, 0
      %p158 = por %p156, %p157
      %p159 = scmp.le.s32.totalorder 1, %s13
      %p160 = scmp.lt.s32.totalorder %s13, 3
      %p161 = pnand %p159, %p160
      %p162 = pneg %p161
      // Predicated region
      $region9: #{phm_conv1d.1} parent=5 // pred_check
        _
      $region10: #{phm_conv1d.1} parent=5 // pred_check_branch
        %164 = sbr.rel (%p161) target = $region12
      $region11: #{phm_conv1d.1} parent=5 // pred_region
        %s165 = ssub.s32 %s13, 1
        // Predicated region
        $region13: #{phm_conv1d.1} parent=11 // pred_check
          %p166 = pneg %p102
        $region14: #{phm_conv1d.1} parent=11 // pred_check_branch
          %168 = sbr.rel (%p166) target = $region16
        $region15: #{phm_conv1d.1} parent=11 // pred_region
          _
        $region16: #{phm_conv1d.1} parent=11 // pred_fallthru
          _
        // Predicated region
        $region17: #{phm_conv1d.1} parent=11 // pred_check
          %p169 = pneg %p123
        $region18: #{phm_conv1d.1} parent=11 // pred_check_branch
          %171 = sbr.rel (%p169) target = $region20
        $region19: #{phm_conv1d.1} parent=11 // pred_region
          _
        $region20: #{phm_conv1d.1} parent=11 // pred_fallthru
          _
      $region12: #{phm_conv1d.1} parent=5 // pred_fallthru
        _
      %p172 = scmp.lt.s32.totalorder %s13, 2
      // Predicated region
      $region21: #{phm_conv1d.1} parent=5 // pred_check
        %p173 = pneg %p172
      $region22: #{phm_conv1d.1} parent=5 // pred_check_branch
        %175 = sbr.rel (%p173) target = $region24
      $region23: #{phm_conv1d.1} parent=5 // pred_region
        // Predicated region
        $region25: #{phm_conv1d.1} parent=23 // pred_check
          %p176 = pneg %p47
        $region26: #{phm_conv1d.1} parent=23 // pred_check_branch
          %178 = sbr.rel (%p176) target = $region28
        $region27: #{phm_conv1d.1} parent=23 // pred_region
          %p179 = scmp.lt.s32.totalorder %s20, 1
          %s180 = scalar_select %p179, %s20, 1
          %p181 = scmp.lt.s32.totalorder %s21, 0
          %s182 = scalar_select %p181, %s21, 0
          %s183 = sadd.s32 %s182, %s180
          %s184 = smul.addr %s183, 8
          %s185 = scalar_lea.vmem %s0, %s184
        $region28: #{phm_conv1d.1} parent=23 // pred_fallthru
          _
        // Predicated region
        $region29: #{phm_conv1d.1} parent=23 // pred_check
          %p186 = pneg %p75
        $region30: #{phm_conv1d.1} parent=23 // pred_check_branch
          %188 = sbr.rel (%p186) target = $region32
        $region31: #{phm_conv1d.1} parent=23 // pred_region
          %p189 = scmp.lt.s32.totalorder %s20, 1
          %s190 = scalar_select %p189, %s20, 1
          %p191 = scmp.lt.s32.totalorder %s21, 0
          %s192 = scalar_select %p191, %s21, 0
          %s193 = sadd.s32 %s192, %s190
          %s194 = smul.addr %s193, 8
          %s195 = scalar_lea.vmem %s1, %s194
        $region32: #{phm_conv1d.1} parent=23 // pred_fallthru
          _
      $region24: #{phm_conv1d.1} parent=5 // pred_fallthru
        _
      %p196 = scmp.le.s32.totalorder 1, %s13
      %p197 = scmp.lt.s32.totalorder %s13, 3
      %p198 = pnand %p196, %p197
      %p199 = pneg %p198
      // Predicated region
      $region33: #{phm_conv1d.1} parent=5 // pred_check
        _
      $region34: #{phm_conv1d.1} parent=5 // pred_check_branch
        %201 = sbr.rel (%p198) target = $region36
      $region35: #{phm_conv1d.1} parent=5 // pred_region
        %s202 = ssub.s32 %s13, 1
        %p203 = scmp.lt.s32.totalorder %s22, 1
        %s204 = scalar_select %p203, %s22, 1
        %p205 = scmp.lt.s32.totalorder %s23, 0
        %s206 = scalar_select %p205, %s23, 0
        %s207 = sadd.s32 %s206, %s204
        %s208 = smul.addr %s207, 8
        %s209 = scalar_lea.vmem %s0, %s208
        %p210 = pneg %p53
        %p211 = pneg %p50
        %p212 = scmp.lt.s32.totalorder %s22, 1
        %s213 = scalar_select %p212, %s22, 1
        %p214 = scmp.lt.s32.totalorder %s23, 0
        %s215 = scalar_select %p214, %s23, 0
        %s216 = sadd.s32 %s215, %s213
        %s217 = smul.addr %s216, 8
        %s218 = scalar_lea.vmem %s1, %s217
        %p219 = pneg %p81
        %p220 = pneg %p78
        %p221 = pneg %p102
        %p222 = pneg %p99
        %p223 = pneg %p123
        %p224 = pneg %p120
        %p225 = pneg %p151
        %p226 = pneg %p148
        %s227 = sand.u32 %s138, 1
        %s228 = scalar_lea.sflag [#allocation3], %s227
        %s229 = sand.u32 %s138, 1
        %s230 = smul.addr %s229, 8
        %s231 = scalar_lea.vmem [#allocation2], %s230
        %p232 = scmp.lt.s32.totalorder %s22, 1
        %s233 = scalar_select %p232, %s22, 1
        %p234 = scmp.lt.s32.totalorder %s23, 0
        %s235 = scalar_select %p234, %s23, 0
        %s236 = sadd.s32 %s235, %s233
        %s237 = smul.addr %s236, 8
        %s238 = scalar_lea.vmem %s0, %s237
        %p239 = scmp.lt.s32.totalorder %s22, 1
        %s240 = scalar_select %p239, %s22, 1
        %p241 = scmp.lt.s32.totalorder %s23, 0
        %s242 = scalar_select %p241, %s23, 0
        %s243 = sadd.s32 %s242, %s240
        %s244 = smul.addr %s243, 8
        %s245 = scalar_lea.vmem %s1, %s244
        %v246 = vld [vmem:[%s238] sm:$0xff]
        %v247 = vld [vmem:[%s245] sm:$0xff]
        %249 = vrot.lane.b32.xlu0 %v246, 1
        %v250 = vpop.permute.xlu0 %249
        %253 = vrot.lane.b32.xlu0 %v247, 16
        %v254 = vpop.permute.xlu0 %253
        %vm256 = vcmask 7168
        %v257 = vsel %vm256, %v247, %v250
        %vm258 = vcmask 138240
        %v259 = vsel %vm258, %v257, %v254
        %261 = vrot.lane.b32.xlu0 %v259, 127
        %v262 = vpop.permute.xlu0 %261
        %264 = vrot.lane.b32.xlu0 %v259, 126
        %v265 = vpop.permute.xlu0 %264
        %v267 = vld [vmem:[%s2] sm:$0xff]
        %v268 = vld [vmem:[%s3] sm:$0xff]
        %270 = vset.pattern.permute.xlu0 0
        %271 = vperm.xlu0 %270, %v268
        %v272 = vpop.permute.xlu0 %271
        %vm274 = vcmask 195584
        %v276 = vsel %vm274, %v267, 0
        %278 = vmatpush.msra.mxu0 0.0
        %279 = vmatpush.msra.mxu0 0.0
        %280 = vmatpush.msra.mxu0 0.0
        %281 = vmatpush.msra.mxu0 0.0
        %282 = vmatpush.msra.mxu0 0.0
        %283 = vmatpush.msra.mxu0 0.0
        %284 = vmatpush.msra.mxu0 0.0
        %285 = vmatpush.msra.mxu0 0.0
        %286 = vmatpush.msra.mxu0 0.0
        %287 = vmatpush.msra.mxu0 0.0
        %288 = vmatpush.msra.mxu0 0.0
        %289 = vmatpush.msra.mxu0 0.0
        %290 = vmatpush.msra.mxu0 0.0
        %291 = vmatpush.msra.mxu0 %v265
        %292 = vmatpush.msra.mxu0 %v262
        %293 = vmatpush.msra.mxu0 %v259
        %294 = vmatmul.f32.gmra.mxu0 %v276
        %v295 = vpop.f32.mrf.mxu0
        %v296 = vadd.f32 %v272, %v295
        %297 = vdwg.mxu0
        %vm298 = vcmask 130048
        %299 = vst.msk [vmem:[%s231] sm:$0xff] %vm298, %v296
        %s300 = sand.u32 %s138, 1
        %s301 = scalar_lea.sflag [#allocation3], %s300
        %s302 = sand.u32 %s138, 1
        %s303 = smul.addr %s302, 8
        %s304 = scalar_lea.vmem [#allocation2], %s303
        // Predicated region
        $region37: #{phm_conv1d.1} parent=35 // pred_check
          %p305 = pneg %p148
        $region38: #{phm_conv1d.1} parent=35 // pred_check_branch
          %307 = sbr.rel (%p305) target = $region40
        $region39: #{phm_conv1d.1} parent=35 // pred_region
          %309 = vsyncadd %s301, 0
          %s310 = sadd.s32 %s23, %s22
          %s311 = smul.addr %s310, 8
          %s312 = scalar_lea.hbm %s4, %s311
          %s314 = sshll.u32 %s304, 4
          %s315 = int_to_ptr.vmem [resolvable:$true] %s314
          %s316 = sshll.u32 %s312, 4
          %s317 = int_to_ptr.hbm [resolvable:$true] %s316
          %319 = dma.vmem_to_hbm [thread:$0]  %s315, 128, %s317, %s301
        $region40: #{phm_conv1d.1} parent=35 // pred_fallthru
          _
      $region36: #{phm_conv1d.1} parent=5 // pred_fallthru
        _
      %p320 = scmp.le.s32.totalorder 2, %s13
      // Predicated region
      $region41: #{phm_conv1d.1} parent=5 // pred_check
        %p321 = pneg %p320
      $region42: #{phm_conv1d.1} parent=5 // pred_check_branch
        %323 = sbr.rel (%p321) target = $region44
      $region43: #{phm_conv1d.1} parent=5 // pred_region
        %s324 = ssub.s32 %s13, 2
        // Predicated region
        $region45: #{phm_conv1d.1} parent=43 // pred_check
          %p325 = pneg %p154
        $region46: #{phm_conv1d.1} parent=43 // pred_check_branch
          %327 = sbr.rel (%p325) target = $region48
        $region47: #{phm_conv1d.1} parent=43 // pred_region
          %s328 = sand.u32 %s139, 1
          %s329 = scalar_lea.sflag [#allocation3], %s328
          %s330 = sand.u32 %s139, 1
          %s331 = smul.addr %s330, 8
          %s332 = scalar_lea.vmem [#allocation2], %s331
          %334 = dma.done %s329, 128
        $region48: #{phm_conv1d.1} parent=43 // pred_fallthru
          _
      $region44: #{phm_conv1d.1} parent=5 // pred_fallthru
        _
    $region6: #{phm_conv1d.1} parent=1 // loop_footer
      %s17 = sadd.s32 1, %s13
    $region7: #{phm_conv1d.1} parent=1 // loop_footer_branch
      %12 = sbr.rel target = $region3
    $region8: #{phm_conv1d.1} parent=1 // loop_exit
      _
    %335 = vsyncpa [#allocation3], 1
    %s336 = scalar_lea.sflag [#allocation3], 1
    %337 = vsyncpa %s336, 1

</llo_original>
